<compile_context>
chip_gen: v7x
topology: tpu7x:2x2x1
jax: 0.10.0
libtpu: 0.0.40
codegen_flags: <defaults>
</compile_context>

<pallas_src>
import jax
import jax.numpy as jnp
from jax.experimental import pallas as pl
from jax.experimental.pallas import tpu as pltpu


def _critic_kernel(s_ref, a_ref, w1_ref, b1_ref, w2_ref, b2_ref,
                   wq_ref, bq_ref, out_ref):
    """Feature-major MLP: refs hold x^T tiles; out is (n_critics, tile_B)."""
    d_state = s_ref.shape[0]
    n_act = a_ref.shape[0]
    tb = s_ref.shape[1]
    h1_total = w1_ref.shape[0]
    h2_total = w2_ref.shape[0]
    n_critics = out_ref.shape[0]
    h2 = h2_total // n_critics

    s = s_ref[...]                                   # (d_state, tb)
    a = a_ref[...]                                   # (n_act,   tb)
    w1 = w1_ref[...]                                 # (H1_total, d_state+n_act)

    # ---- fc1: h1 = relu(W1 @ [s; a] + b1), concat fused away ---------------
    if d_state + n_act <= 16:
        # Tiny contraction dim: VPU rank-1 updates instead of a >95%-padding
        # MXU pass (leaves the MXU free for fc2).
        acc = jnp.zeros((h1_total, tb), jnp.float32)
        for k in range(d_state):
            acc = acc + w1[:, k:k + 1] * s[k:k + 1, :]
        for k in range(n_act):
            acc = acc + w1[:, d_state + k:d_state + k + 1] * a[k:k + 1, :]
    else:
        acc = jnp.dot(w1[:, :d_state], s, preferred_element_type=jnp.float32)
        acc = acc + jnp.dot(w1[:, d_state:], a,
                            preferred_element_type=jnp.float32)
    h1 = jnp.maximum(acc + b1_ref[...], 0.0)         # (H1_total, tb)

    # ---- fc2: the one real MXU matmul ---------------------------------------
    z = jnp.dot(w2_ref[...], h1, preferred_element_type=jnp.float32)
    z = jnp.maximum(z + b2_ref[...], 0.0)            # (H2_total, tb)

    # ---- Q head(s): VPU multiply + XLU sublane reduce -> lane-dense row -----
    zq = z * wq_ref[...]                             # (H2_total, tb)
    for i in range(n_critics):
        q_i = jnp.sum(zq[i * h2:(i + 1) * h2, :], axis=0, keepdims=True)
        q_i = q_i + bq_ref[i:i + 1, :]               # (1, tb)
        out_ref[i:i + 1, :] = q_i.astype(out_ref.dtype)


_TB_MAX = 4096          # rows per grid step; activations at 4096 are < 2 MiB


def _round_up(x, m):
    return (x + m - 1) // m * m


def _batch_tiling(b):
    """(tile, padded_B): one full-size tile for small B, otherwise >= 2 big
    lane-aligned tiles.  Never falls back to tiny tiles."""
    if b <= 256:
        return b, b                                  # single block == full dim
    tb = min(_TB_MAX, _round_up(-(-b // 2), 128))    # >=2 tiles, 128-aligned
    return tb, _round_up(b, tb)


def _forward_stacked(state, actions, stacked):
    """Run the kernel on (possibly critic-stacked) params.

    state: (B, d_state), actions: (B, n_actions). Returns (n_critics, B)."""
    w1, b1, w2, b2, wq, bq = stacked
    bsz = state.shape[0]
    n_critics = bq.shape[0]
    tb, b_pad = _batch_tiling(bsz)

    # Layout plumbing: feed the kernel feature-major tiles.
    s_t = state.astype(jnp.float32).T                # (d_state, B)
    a_t = actions.astype(jnp.float32).T              # (n_actions, B)
    if b_pad != bsz:
        s_t = jnp.pad(s_t, ((0, 0), (0, b_pad - bsz)))
        a_t = jnp.pad(a_t, ((0, 0), (0, b_pad - bsz)))

    full = lambda arr: pl.BlockSpec(arr.shape, lambda i: (0,) * arr.ndim)

    d_in = s_t.shape[0] + a_t.shape[0]
    flops = 2 * bsz * (d_in * w1.shape[0] + w2.shape[1] * w2.shape[0]
                       + w2.shape[0])
    bytes_accessed = 4 * (s_t.size + a_t.size + n_critics * b_pad
                          + sum(int(p.size) for p in stacked))

    q = pl.pallas_call(
        _critic_kernel,
        out_shape=jax.ShapeDtypeStruct((n_critics, b_pad), jnp.float32),
        grid=(b_pad // tb,),
        in_specs=[
            pl.BlockSpec((s_t.shape[0], tb), lambda i: (0, i)),   # state^T
            pl.BlockSpec((a_t.shape[0], tb), lambda i: (0, i)),   # actions^T
            full(w1), full(b1), full(w2), full(b2), full(wq), full(bq),
        ],
        out_specs=pl.BlockSpec((n_critics, tb), lambda i: (0, i)),
        compiler_params=pltpu.CompilerParams(
            dimension_semantics=("parallel",)),      # v7x: shard tiles on 2 TCs
        cost_estimate=pl.CostEstimate(flops=int(flops), transcendentals=0,
                                      bytes_accessed=int(bytes_accessed)),
    )(s_t, a_t, w1, b1, w2, b2, wq, bq)
    return q[:, :bsz]


@jax.jit
def critic_forward(state, actions, params):
    """Single critic -- matches CriticNetwork.forward.  Returns (B, 1)."""
    q = _forward_stacked(state, actions, params)     # (1, B), lane-dense
    return q.reshape(state.shape[0], 1)


def _stack_twin(pa, pb):
    """Stack two critics' params so one kernel call evaluates both."""
    w1a, b1a, w2a, b2a, wqa, bqa = pa
    w1b, b1b, w2b, b2b, wqb, bqb = pb
    w1 = jnp.concatenate([w1a, w1b], axis=0)
    b1 = jnp.concatenate([b1a, b1b], axis=0)
    z_ab = jnp.zeros((w2a.shape[0], w2b.shape[1]), w2a.dtype)
    z_ba = jnp.zeros((w2b.shape[0], w2a.shape[1]), w2b.dtype)
    w2 = jnp.concatenate([jnp.concatenate([w2a, z_ab], axis=1),
                          jnp.concatenate([z_ba, w2b], axis=1)], axis=0)
    b2 = jnp.concatenate([b2a, b2b], axis=0)
    wq = jnp.concatenate([wqa, wqb], axis=0)
    bq = jnp.concatenate([bqa, bqb], axis=0)
    return (w1, b1, w2, b2, wq, bq)


@jax.jit
def twin_critic_forward(state, actions, params_a, params_b):
    """Both SAC critics in ONE pallas_call.  Returns (q1, q2), each (B, 1)."""
    q = _forward_stacked(state, actions, _stack_twin(params_a, params_b))
    return q[0, :, None], q[1, :, None]


def init_params(key, d_state, n_actions, h1_size, h2_size):
    """torch.nn.Linear default init U(-1/sqrt(fan_in), +), torch-native layout:
    weights (out, in), biases (out, 1)."""
    def uniform(k, shape, fan_in):
        bound = 1.0 / float(fan_in) ** 0.5
        return jax.random.uniform(k, shape, jnp.float32, -bound, bound)

    d_in = d_state + n_actions
    k1w, k1b, k2w, k2b, k3w, k3b = jax.random.split(key, 6)
    w1 = uniform(k1w, (h1_size, d_in), d_in)
    b1 = uniform(k1b, (h1_size, 1), d_in)
    w2 = uniform(k2w, (h2_size, h1_size), h1_size)
    b2 = uniform(k2b, (h2_size, 1), h1_size)
    wq = uniform(k3w, (h2_size, 1), h2_size)     # torch Q.weight (1, H2)^T
    bq = uniform(k3b, (1, 1), h2_size)
    return (w1, b1, w2, b2, wq, bq)


def critic_ref(state, actions, params):
    """Pure-JAX reference matching the PyTorch forward exactly."""
    w1, b1, w2, b2, wq, bq = params
    x = jnp.concatenate([state, actions], axis=1)
    x = jax.nn.relu(x @ w1.T + b1[:, 0])
    x = jax.nn.relu(x @ w2.T + b2[:, 0])
    return x @ wq + bq                               # (B, 1)


# TODO(synk): the Adam optimizer / save_checkpoint / load_checkpoint from the
# PyTorch module are training/IO state, not part of the forward pass, and are
# intentionally not ported.

if __name__ == "__main__":
    # Small shapes consistent with the module:
    #   input_shape=(4,), n_actions=2, h1_size=32, h2_size=32, batch=8
    B, D_STATE, N_ACTIONS, H1, H2 = 8, 4, 2, 32, 32

    key = jax.random.PRNGKey(0)
    k_state, k_act, k_p1, k_p2 = jax.random.split(key, 4)
    state = jax.random.normal(k_state, (B, D_STATE), jnp.float32)
    actions = jax.random.normal(k_act, (B, N_ACTIONS), jnp.float32)
    params1 = init_params(k_p1, D_STATE, N_ACTIONS, H1, H2)
    params2 = init_params(k_p2, D_STATE, N_ACTIONS, H1, H2)

    # Single critic (exactly the PyTorch module's forward).
    q = jax.block_until_ready(critic_forward(state, actions, params1))
    q_ref = critic_ref(state, actions, params1)
    assert q.shape == (B, 1)
    assert jnp.allclose(q, q_ref, atol=1e-4, rtol=1e-4), "single-critic mismatch"

    # Fused twin critics: one pallas_call computes both SAC Q heads.
    q1, q2 = jax.block_until_ready(
        twin_critic_forward(state, actions, params1, params2))
    assert jnp.allclose(q1, critic_ref(state, actions, params1),
                        atol=1e-4, rtol=1e-4), "twin critic 1 mismatch"
    assert jnp.allclose(q2, critic_ref(state, actions, params2),
                        atol=1e-4, rtol=1e-4), "twin critic 2 mismatch"

    print("KERNEL_OK")
</pallas_src>

<mosaic_0001>
module attributes {stable_mosaic.version = 11 : i64} {
  func.func @_critic_kernel(%arg0: i32, %arg1: memref<4x8xf32, #tpu.memory_space<vmem>>, %arg2: memref<2x8xf32, #tpu.memory_space<vmem>>, %arg3: memref<32x6xf32, #tpu.memory_space<vmem>>, %arg4: memref<32x1xf32, #tpu.memory_space<vmem>>, %arg5: memref<32x32xf32, #tpu.memory_space<vmem>>, %arg6: memref<32x1xf32, #tpu.memory_space<vmem>>, %arg7: memref<32x1xf32, #tpu.memory_space<vmem>>, %arg8: memref<1x1xf32, #tpu.memory_space<vmem>>, %arg9: memref<1x8xf32, #tpu.memory_space<vmem>>) attributes {dimension_semantics = [#tpu.dimension_semantics<parallel>], iteration_bounds = array<i64: 1>, scalar_prefetch = 0 : i64, scratch_operands = 0 : i64, tpu.core_type = #tpu.core_type<tc>, window_params = [{transform_indices = @transform_0, window_bounds = array<i64: 4, 8>}, {transform_indices = @transform_1, window_bounds = array<i64: 2, 8>}, {pipeline_mode = #tpu.pipeline_mode<synchronous>, transform_indices = @transform_2, window_bounds = array<i64: 32, 6>}, {pipeline_mode = #tpu.pipeline_mode<synchronous>, transform_indices = @transform_3, window_bounds = array<i64: 32, 1>}, {pipeline_mode = #tpu.pipeline_mode<synchronous>, transform_indices = @transform_4, window_bounds = array<i64: 32, 32>}, {pipeline_mode = #tpu.pipeline_mode<synchronous>, transform_indices = @transform_5, window_bounds = array<i64: 32, 1>}, {pipeline_mode = #tpu.pipeline_mode<synchronous>, transform_indices = @transform_6, window_bounds = array<i64: 32, 1>}, {pipeline_mode = #tpu.pipeline_mode<synchronous>, transform_indices = @transform_7, window_bounds = array<i64: 1, 1>}, {transform_indices = @transform_8, window_bounds = array<i64: 1, 8>}]} {
    %c0 = arith.constant 0 : index
    %c0_0 = arith.constant 0 : index
    %0 = vector.load %arg1[%c0, %c0_0] : memref<4x8xf32, #tpu.memory_space<vmem>>, vector<4x8xf32>
    %c0_1 = arith.constant 0 : index
    %c0_2 = arith.constant 0 : index
    %1 = vector.load %arg2[%c0_1, %c0_2] : memref<2x8xf32, #tpu.memory_space<vmem>>, vector<2x8xf32>
    %c0_3 = arith.constant 0 : index
    %c0_4 = arith.constant 0 : index
    %2 = vector.load %arg3[%c0_3, %c0_4] : memref<32x6xf32, #tpu.memory_space<vmem>>, vector<32x6xf32>
    %cst = arith.constant 0.000000e+00 : f32
    %3 = vector.broadcast %cst : f32 to vector<32x8xf32>
    %4 = vector.extract_strided_slice %2 {offsets = [0, 0], sizes = [32, 1], strides = [1, 1]} : vector<32x6xf32> to vector<32x1xf32>
    %5 = vector.extract_strided_slice %0 {offsets = [0, 0], sizes = [1, 8], strides = [1, 1]} : vector<4x8xf32> to vector<1x8xf32>
    %6 = vector.broadcast %4 : vector<32x1xf32> to vector<32x8xf32>
    %7 = vector.broadcast %5 : vector<1x8xf32> to vector<32x8xf32>
    %8 = arith.mulf %6, %7 : vector<32x8xf32>
    %9 = arith.addf %3, %8 : vector<32x8xf32>
    %10 = vector.extract_strided_slice %2 {offsets = [0, 1], sizes = [32, 1], strides = [1, 1]} : vector<32x6xf32> to vector<32x1xf32>
    %11 = vector.extract_strided_slice %0 {offsets = [1, 0], sizes = [1, 8], strides = [1, 1]} : vector<4x8xf32> to vector<1x8xf32>
    %12 = vector.broadcast %10 : vector<32x1xf32> to vector<32x8xf32>
    %13 = vector.broadcast %11 : vector<1x8xf32> to vector<32x8xf32>
    %14 = arith.mulf %12, %13 : vector<32x8xf32>
    %15 = arith.addf %9, %14 : vector<32x8xf32>
    %16 = vector.extract_strided_slice %2 {offsets = [0, 2], sizes = [32, 1], strides = [1, 1]} : vector<32x6xf32> to vector<32x1xf32>
    %17 = vector.extract_strided_slice %0 {offsets = [2, 0], sizes = [1, 8], strides = [1, 1]} : vector<4x8xf32> to vector<1x8xf32>
    %18 = vector.broadcast %16 : vector<32x1xf32> to vector<32x8xf32>
    %19 = vector.broadcast %17 : vector<1x8xf32> to vector<32x8xf32>
    %20 = arith.mulf %18, %19 : vector<32x8xf32>
    %21 = arith.addf %15, %20 : vector<32x8xf32>
    %22 = vector.extract_strided_slice %2 {offsets = [0, 3], sizes = [32, 1], strides = [1, 1]} : vector<32x6xf32> to vector<32x1xf32>
    %23 = vector.extract_strided_slice %0 {offsets = [3, 0], sizes = [1, 8], strides = [1, 1]} : vector<4x8xf32> to vector<1x8xf32>
    %24 = vector.broadcast %22 : vector<32x1xf32> to vector<32x8xf32>
    %25 = vector.broadcast %23 : vector<1x8xf32> to vector<32x8xf32>
    %26 = arith.mulf %24, %25 : vector<32x8xf32>
    %27 = arith.addf %21, %26 : vector<32x8xf32>
    %28 = vector.extract_strided_slice %2 {offsets = [0, 4], sizes = [32, 1], strides = [1, 1]} : vector<32x6xf32> to vector<32x1xf32>
    %29 = vector.extract_strided_slice %1 {offsets = [0, 0], sizes = [1, 8], strides = [1, 1]} : vector<2x8xf32> to vector<1x8xf32>
    %30 = vector.broadcast %28 : vector<32x1xf32> to vector<32x8xf32>
    %31 = vector.broadcast %29 : vector<1x8xf32> to vector<32x8xf32>
    %32 = arith.mulf %30, %31 : vector<32x8xf32>
    %33 = arith.addf %27, %32 : vector<32x8xf32>
    %34 = vector.extract_strided_slice %2 {offsets = [0, 5], sizes = [32, 1], strides = [1, 1]} : vector<32x6xf32> to vector<32x1xf32>
    %35 = vector.extract_strided_slice %1 {offsets = [1, 0], sizes = [1, 8], strides = [1, 1]} : vector<2x8xf32> to vector<1x8xf32>
    %36 = vector.broadcast %34 : vector<32x1xf32> to vector<32x8xf32>
    %37 = vector.broadcast %35 : vector<1x8xf32> to vector<32x8xf32>
    %38 = arith.mulf %36, %37 : vector<32x8xf32>
    %39 = arith.addf %33, %38 : vector<32x8xf32>
    %c0_5 = arith.constant 0 : index
    %c0_6 = arith.constant 0 : index
    %40 = vector.load %arg4[%c0_5, %c0_6] : memref<32x1xf32, #tpu.memory_space<vmem>>, vector<32x1xf32>
    %41 = vector.broadcast %40 : vector<32x1xf32> to vector<32x8xf32>
    %42 = arith.addf %39, %41 : vector<32x8xf32>
    %cst_7 = arith.constant 0.000000e+00 : f32
    %43 = vector.broadcast %cst_7 : f32 to vector<32x8xf32>
    %44 = arith.maximumf %42, %43 : vector<32x8xf32>
    %c0_8 = arith.constant 0 : index
    %c0_9 = arith.constant 0 : index
    %45 = vector.load %arg5[%c0_8, %c0_9] : memref<32x32xf32, #tpu.memory_space<vmem>>, vector<32x32xf32>
    %cst_10 = arith.constant dense<0.000000e+00> : vector<32x8xf32>
    %46 = tpu.matmul %45, %44, %cst_10 {dimension_numbers = #tpu.dot_dimension_numbers<[1], [0], [0], [1], [0, 0, 1, 1], [], []>} : vector<32x32xf32>, vector<32x8xf32>, vector<32x8xf32> -> vector<32x8xf32>
    %c0_11 = arith.constant 0 : index
    %c0_12 = arith.constant 0 : index
    %47 = vector.load %arg6[%c0_11, %c0_12] : memref<32x1xf32, #tpu.memory_space<vmem>>, vector<32x1xf32>
    %48 = vector.broadcast %47 : vector<32x1xf32> to vector<32x8xf32>
    %49 = arith.addf %46, %48 : vector<32x8xf32>
    %cst_13 = arith.constant 0.000000e+00 : f32
    %50 = vector.broadcast %cst_13 : f32 to vector<32x8xf32>
    %51 = arith.maximumf %49, %50 : vector<32x8xf32>
    %c0_14 = arith.constant 0 : index
    %c0_15 = arith.constant 0 : index
    %52 = vector.load %arg7[%c0_14, %c0_15] : memref<32x1xf32, #tpu.memory_space<vmem>>, vector<32x1xf32>
    %53 = vector.broadcast %52 : vector<32x1xf32> to vector<32x8xf32>
    %54 = arith.mulf %51, %53 : vector<32x8xf32>
    %cst_16 = arith.constant dense<0.000000e+00> : vector<8xf32>
    %55 = vector.multi_reduction <add>, %54, %cst_16 [0] : vector<32x8xf32> to vector<8xf32>
    %56 = vector.shape_cast %55 : vector<8xf32> to vector<1x8xf32>
    %c0_17 = arith.constant 0 : index
    %c0_18 = arith.constant 0 : index
    %57 = vector.load %arg8[%c0_17, %c0_18] : memref<1x1xf32, #tpu.memory_space<vmem>>, vector<1x1xf32>
    %58 = vector.broadcast %57 : vector<1x1xf32> to vector<1x8xf32>
    %59 = arith.addf %56, %58 : vector<1x8xf32>
    %c0_19 = arith.constant 0 : index
    %c0_20 = arith.constant 0 : index
    %60 = vector.load %arg9[%c0_19, %c0_20] : memref<1x8xf32, #tpu.memory_space<vmem>>, vector<1x8xf32>
    tpu.vector_store %arg9[%c0_19, %c0_20], %59 {strides = array<i32>} : memref<1x8xf32, #tpu.memory_space<vmem>>, vector<1x8xf32>,
    return
  }
  func.func @transform_0(%arg0: i32) -> (i32, i32) {
    %c0_i32 = arith.constant 0 : i32
    %c0_i32_0 = arith.constant 0 : i32
    return %c0_i32, %arg0 : i32, i32
  }
  func.func @transform_1(%arg0: i32) -> (i32, i32) {
    %c0_i32 = arith.constant 0 : i32
    %c0_i32_0 = arith.constant 0 : i32
    return %c0_i32, %arg0 : i32, i32
  }
  func.func @transform_2(%arg0: i32) -> (i32, i32) {
    %c0_i32 = arith.constant 0 : i32
    %c0_i32_0 = arith.constant 0 : i32
    %c0_i32_1 = arith.constant 0 : i32
    return %c0_i32, %c0_i32_0 : i32, i32
  }
  func.func @transform_3(%arg0: i32) -> (i32, i32) {
    %c0_i32 = arith.constant 0 : i32
    %c0_i32_0 = arith.constant 0 : i32
    %c0_i32_1 = arith.constant 0 : i32
    return %c0_i32, %c0_i32_0 : i32, i32
  }
  func.func @transform_4(%arg0: i32) -> (i32, i32) {
    %c0_i32 = arith.constant 0 : i32
    %c0_i32_0 = arith.constant 0 : i32
    %c0_i32_1 = arith.constant 0 : i32
    return %c0_i32, %c0_i32_0 : i32, i32
  }
  func.func @transform_5(%arg0: i32) -> (i32, i32) {
    %c0_i32 = arith.constant 0 : i32
    %c0_i32_0 = arith.constant 0 : i32
    %c0_i32_1 = arith.constant 0 : i32
    return %c0_i32, %c0_i32_0 : i32, i32
  }
  func.func @transform_6(%arg0: i32) -> (i32, i32) {
    %c0_i32 = arith.constant 0 : i32
    %c0_i32_0 = arith.constant 0 : i32
    %c0_i32_1 = arith.constant 0 : i32
    return %c0_i32, %c0_i32_0 : i32, i32
  }
  func.func @transform_7(%arg0: i32) -> (i32, i32) {
    %c0_i32 = arith.constant 0 : i32
    %c0_i32_0 = arith.constant 0 : i32
    %c0_i32_1 = arith.constant 0 : i32
    return %c0_i32, %c0_i32_0 : i32, i32
  }
  func.func @transform_8(%arg0: i32) -> (i32, i32) {
    %c0_i32 = arith.constant 0 : i32
    %c0_i32_0 = arith.constant 0 : i32
    return %c0_i32, %arg0 : i32, i32
  }
}

</mosaic_0001>

<llo_original>
// kernel: critic_forward.1
$region0: #{critic_forward.1}
  #allocation0 [shape = 'u32[]', space=smem, size = 0x4, offset = 0x4, fixed_abs, tag = 'smem constant byte address 0x4 - core index']
  #allocation1 [shape = 'u32[144,128]{1,0:T(1,128)}', space=vmem, size = 0x12000, scoped, tag = 'internal scratch']
  #allocation2 [shape = 'f32[1,1]{1,0:T(1,128)S(1)}', space=vmem, size = 0x200, scoped, tag = 'scoped memory for critic_forward.1']
  %s0 = inlined_call_operand.vmem [shape: f32[4,8], index: 0, kind: input, shape index: {}]
  %s1 = inlined_call_operand.vmem [shape: f32[2,8], index: 1, kind: input, shape index: {}]
  %s2 = inlined_call_operand.vmem [shape: f32[32,6], index: 2, kind: input, shape index: {}]
  %s3 = inlined_call_operand.vmem [shape: f32[32,1], index: 3, kind: input, shape index: {}]
  %s4 = inlined_call_operand.vmem [shape: f32[32,32], index: 4, kind: input, shape index: {}]
  %s5 = inlined_call_operand.vmem [shape: f32[32,1], index: 5, kind: input, shape index: {}]
  %s6 = inlined_call_operand.vmem [shape: f32[32,1], index: 6, kind: input, shape index: {}]
  %s7 = inlined_call_operand.<no memory space> [shape: f32[1,1], index: 7, kind: input, shape index: {}]
  %s8 = inlined_call_operand.hbm [shape: f32[1,8], index: 8, kind: output, shape index: {}]
  %s9 = sld [smem:[#allocation0]]
  $region42: #{critic_forward.1} parent=0
    _
  %s11 = ssub.s32 1, %s9
  %s12 = scalar_select 0, %s11, %s9
  %v13 = vstv %s7
  %14 = vst [vmem:[#allocation2] sm:$0x1] %v13
  $region1: #{critic_forward.1} parent=0
    #allocation3 [shape = 'u8[512]{0}', space=vmem, size = 0x400, scoped, tag = 'output window, operand 0, single buffered']
    #allocation4 [shape = 's32[1]{0}', space=sflag, size = 0x4, scoped, tag = 'scoped memory for critic_forward.1']
    %15 = vsyncpa [#allocation4], 0
    // Predicated region
    $region2: #{critic_forward.1} parent=1 // pred_check
      _
    $region3: #{critic_forward.1} parent=1 // pred_check_branch
      %17 = sbr.rel (0) target = $region5
    $region4: #{critic_forward.1} parent=1 // pred_region
      _
    $region5: #{critic_forward.1} parent=1 // pred_fallthru
      _
    // Predicated region
    $region6: #{critic_forward.1} parent=1 // pred_check
      _
    $region7: #{critic_forward.1} parent=1 // pred_check_branch
      %19 = sbr.rel (0) target = $region9
    $region8: #{critic_forward.1} parent=1 // pred_region
      _
    $region9: #{critic_forward.1} parent=1 // pred_fallthru
      _
    // Predicated region
    $region10: #{critic_forward.1} parent=1 // pred_check
      _
    $region11: #{critic_forward.1} parent=1 // pred_check_branch
      %21 = sbr.rel (0) target = $region13
    $region12: #{critic_forward.1} parent=1 // pred_region
      _
    $region13: #{critic_forward.1} parent=1 // pred_fallthru
      _
    // Predicated region
    $region14: #{critic_forward.1} parent=1 // pred_check
      _
    $region15: #{critic_forward.1} parent=1 // pred_check_branch
      %23 = sbr.rel (0) target = $region17
    $region16: #{critic_forward.1} parent=1 // pred_region
      _
    $region17: #{critic_forward.1} parent=1 // pred_fallthru
      _
    // Predicated region
    $region18: #{critic_forward.1} parent=1 // pred_check
      _
    $region19: #{critic_forward.1} parent=1 // pred_check_branch
      %25 = sbr.rel (0) target = $region21
    $region20: #{critic_forward.1} parent=1 // pred_region
      _
    $region21: #{critic_forward.1} parent=1 // pred_fallthru
      _
    // Predicated region
    $region22: #{critic_forward.1} parent=1 // pred_check
      _
    $region23: #{critic_forward.1} parent=1 // pred_check_branch
      %27 = sbr.rel (0) target = $region25
    $region24: #{critic_forward.1} parent=1 // pred_region
      _
    $region25: #{critic_forward.1} parent=1 // pred_fallthru
      _
    // Predicated region
    $region26: #{critic_forward.1} parent=1 // pred_check
      _
    $region27: #{critic_forward.1} parent=1 // pred_check_branch
      %29 = sbr.rel (0) target = $region29
    $region28: #{critic_forward.1} parent=1 // pred_region
      _
    $region29: #{critic_forward.1} parent=1 // pred_fallthru
      _
    // Predicated region
    $region30: #{critic_forward.1} parent=1 // pred_check
      _
    $region31: #{critic_forward.1} parent=1 // pred_check_branch
      %31 = sbr.rel (0) target = $region33
    $region32: #{critic_forward.1} parent=1 // pred_region
      _
    $region33: #{critic_forward.1} parent=1 // pred_fallthru
      _
    %v32 = vld [vmem:[%s0] sm:$0xf]
    %v33 = vld [vmem:[%s1] sm:$0x3]
    %v34 = vld [vmem:[%s2] sm:$0xff]
    %v35 = vld [vmem:[%s2 + $0x8] sm:$0xff]
    %v36 = vld [vmem:[%s2 + $0x10] sm:$0xff]
    %v37 = vld [vmem:[%s2 + $0x18] sm:$0xff]
    %39 = vset.pattern.permute.xlu0 0
    %40 = vperm.xlu0 %39, %v34
    %v41 = vpop.permute.xlu0 %40
    %44 = vset.pattern.permute.xlu0 0
    %45 = vperm.xlu0 %44, %v35
    %v46 = vpop.permute.xlu0 %45
    %49 = vset.pattern.permute.xlu0 0
    %50 = vperm.xlu0 %49, %v36
    %v51 = vpop.permute.xlu0 %50
    %54 = vset.pattern.permute.xlu0 0
    %55 = vperm.xlu0 %54, %v37
    %v56 = vpop.permute.xlu0 %55
    %v58 = vlaneseq
    %v59 = vshrl.u32 %v58, 7
    %v60 = vsub.s32 0, %v59
    %v61 = vrot.slane %v32, %v60
    %v62 = vmul.f32 %v41, %v61
    %v63 = vmul.f32 %v46, %v61
    %v64 = vmul.f32 %v51, %v61
    %v65 = vmul.f32 %v56, %v61
    %v66 = vadd.f32 %v62, 0.0
    %v67 = vadd.f32 %v63, 0.0
    %v68 = vadd.f32 %v64, 0.0
    %v69 = vadd.f32 %v65, 0.0
    %70 = vset.pattern.permute.xlu0 1
    %71 = vperm.xlu0 %70, %v34
    %v72 = vpop.permute.xlu0 %71
    %74 = vset.pattern.permute.xlu0 1
    %75 = vperm.xlu0 %74, %v35
    %v76 = vpop.permute.xlu0 %75
    %78 = vset.pattern.permute.xlu0 1
    %79 = vperm.xlu0 %78, %v36
    %v80 = vpop.permute.xlu0 %79
    %82 = vset.pattern.permute.xlu0 1
    %83 = vperm.xlu0 %82, %v37
    %v84 = vpop.permute.xlu0 %83
    %v86 = vlaneseq
    %v87 = vshrl.u32 %v86, 7
    %v88 = vsub.s32 1, %v87
    %v89 = vrot.slane %v32, %v88
    %v90 = vmul.f32 %v72, %v89
    %v91 = vmul.f32 %v76, %v89
    %v92 = vmul.f32 %v80, %v89
    %v93 = vmul.f32 %v84, %v89
    %v94 = vadd.f32 %v66, %v90
    %v95 = vadd.f32 %v67, %v91
    %v96 = vadd.f32 %v68, %v92
    %v97 = vadd.f32 %v69, %v93
    %98 = vset.pattern.permute.xlu0 2
    %99 = vperm.xlu0 %98, %v34
    %v100 = vpop.permute.xlu0 %99
    %102 = vset.pattern.permute.xlu0 2
    %103 = vperm.xlu0 %102, %v35
    %v104 = vpop.permute.xlu0 %103
    %106 = vset.pattern.permute.xlu0 2
    %107 = vperm.xlu0 %106, %v36
    %v108 = vpop.permute.xlu0 %107
    %110 = vset.pattern.permute.xlu0 2
    %111 = vperm.xlu0 %110, %v37
    %v112 = vpop.permute.xlu0 %111
    %v114 = vlaneseq
    %v115 = vshrl.u32 %v114, 7
    %v116 = vsub.s32 2, %v115
    %v117 = vrot.slane %v32, %v116
    %v118 = vmul.f32 %v100, %v117
    %v119 = vmul.f32 %v104, %v117
    %v120 = vmul.f32 %v108, %v117
    %v121 = vmul.f32 %v112, %v117
    %v122 = vadd.f32 %v94, %v118
    %v123 = vadd.f32 %v95, %v119
    %v124 = vadd.f32 %v96, %v120
    %v125 = vadd.f32 %v97, %v121
    %126 = vset.pattern.permute.xlu0 3
    %127 = vperm.xlu0 %126, %v34
    %v128 = vpop.permute.xlu0 %127
    %130 = vset.pattern.permute.xlu0 3
    %131 = vperm.xlu0 %130, %v35
    %v132 = vpop.permute.xlu0 %131
    %134 = vset.pattern.permute.xlu0 3
    %135 = vperm.xlu0 %134, %v36
    %v136 = vpop.permute.xlu0 %135
    %138 = vset.pattern.permute.xlu0 3
    %139 = vperm.xlu0 %138, %v37
    %v140 = vpop.permute.xlu0 %139
    %v142 = vlaneseq
    %v143 = vshrl.u32 %v142, 7
    %v144 = vsub.s32 3, %v143
    %v145 = vrot.slane %v32, %v144
    %v146 = vmul.f32 %v128, %v145
    %v147 = vmul.f32 %v132, %v145
    %v148 = vmul.f32 %v136, %v145
    %v149 = vmul.f32 %v140, %v145
    %v150 = vadd.f32 %v122, %v146
    %v151 = vadd.f32 %v123, %v147
    %v152 = vadd.f32 %v124, %v148
    %v153 = vadd.f32 %v125, %v149
    %154 = vset.pattern.permute.xlu0 4
    %155 = vperm.xlu0 %154, %v34
    %v156 = vpop.permute.xlu0 %155
    %158 = vset.pattern.permute.xlu0 4
    %159 = vperm.xlu0 %158, %v35
    %v160 = vpop.permute.xlu0 %159
    %162 = vset.pattern.permute.xlu0 4
    %163 = vperm.xlu0 %162, %v36
    %v164 = vpop.permute.xlu0 %163
    %166 = vset.pattern.permute.xlu0 4
    %167 = vperm.xlu0 %166, %v37
    %v168 = vpop.permute.xlu0 %167
    %v170 = vlaneseq
    %v171 = vshrl.u32 %v170, 7
    %v172 = vsub.s32 0, %v171
    %v173 = vrot.slane %v33, %v172
    %v174 = vmul.f32 %v156, %v173
    %v175 = vmul.f32 %v160, %v173
    %v176 = vmul.f32 %v164, %v173
    %v177 = vmul.f32 %v168, %v173
    %v178 = vadd.f32 %v150, %v174
    %v179 = vadd.f32 %v151, %v175
    %v180 = vadd.f32 %v152, %v176
    %v181 = vadd.f32 %v153, %v177
    %182 = vset.pattern.permute.xlu0 5
    %183 = vperm.xlu0 %182, %v34
    %v184 = vpop.permute.xlu0 %183
    %186 = vset.pattern.permute.xlu0 5
    %187 = vperm.xlu0 %186, %v35
    %v188 = vpop.permute.xlu0 %187
    %190 = vset.pattern.permute.xlu0 5
    %191 = vperm.xlu0 %190, %v36
    %v192 = vpop.permute.xlu0 %191
    %194 = vset.pattern.permute.xlu0 5
    %195 = vperm.xlu0 %194, %v37
    %v196 = vpop.permute.xlu0 %195
    %v198 = vlaneseq
    %v199 = vshrl.u32 %v198, 7
    %v200 = vsub.s32 1, %v199
    %v201 = vrot.slane %v33, %v200
    %v202 = vmul.f32 %v184, %v201
    %v203 = vmul.f32 %v188, %v201
    %v204 = vmul.f32 %v192, %v201
    %v205 = vmul.f32 %v196, %v201
    %v206 = vadd.f32 %v178, %v202
    %v207 = vadd.f32 %v179, %v203
    %v208 = vadd.f32 %v180, %v204
    %v209 = vadd.f32 %v181, %v205
    %v210 = vld [vmem:[%s3] sm:$0xff]
    %v211 = vld [vmem:[%s3 + $0x8] sm:$0xff]
    %v212 = vld [vmem:[%s3 + $0x10] sm:$0xff]
    %v213 = vld [vmem:[%s3 + $0x18] sm:$0xff]
    %215 = vset.pattern.permute.xlu0 0
    %216 = vperm.xlu0 %215, %v210
    %v217 = vpop.permute.xlu0 %216
    %220 = vset.pattern.permute.xlu0 0
    %221 = vperm.xlu0 %220, %v211
    %v222 = vpop.permute.xlu0 %221
    %225 = vset.pattern.permute.xlu0 0
    %226 = vperm.xlu0 %225, %v212
    %v227 = vpop.permute.xlu0 %226
    %230 = vset.pattern.permute.xlu0 0
    %231 = vperm.xlu0 %230, %v213
    %v232 = vpop.permute.xlu0 %231
    %v234 = vadd.f32 %v206, %v217
    %v235 = vadd.f32 %v207, %v222
    %v236 = vadd.f32 %v208, %v227
    %v237 = vadd.f32 %v209, %v232
    %v238 = vmax.f32 %v234, 0.0
    %v239 = vmax.f32 %v235, 0.0
    %v240 = vmax.f32 %v236, 0.0
    %v241 = vmax.f32 %v237, 0.0
    %v242 = vld [vmem:[%s4] sm:$0xff]
    %v243 = vld [vmem:[%s4 + $0x8] sm:$0xff]
    %v244 = vld [vmem:[%s4 + $0x10] sm:$0xff]
    %v245 = vld [vmem:[%s4 + $0x18] sm:$0xff]
    %v246 = vld [vmem:[%s5] sm:$0xff]
    %v247 = vld [vmem:[%s5 + $0x8] sm:$0xff]
    %v248 = vld [vmem:[%s5 + $0x10] sm:$0xff]
    %v249 = vld [vmem:[%s5 + $0x18] sm:$0xff]
    %251 = vset.pattern.permute.xlu0 0
    %252 = vperm.xlu0 %251, %v246
    %v253 = vpop.permute.xlu0 %252
    %256 = vset.pattern.permute.xlu0 0
    %257 = vperm.xlu0 %256, %v247
    %v258 = vpop.permute.xlu0 %257
    %261 = vset.pattern.permute.xlu0 0
    %262 = vperm.xlu0 %261, %v248
    %v263 = vpop.permute.xlu0 %262
    %266 = vset.pattern.permute.xlu0 0
    %267 = vperm.xlu0 %266, %v249
    %v268 = vpop.permute.xlu0 %267
    %vm270 = vcmask 261120
    %v272 = vsel %vm270, %v242, 0
    %v275 = vsel %vm270, %v243, 0
    %v278 = vsel %vm270, %v244, 0
    %v281 = vsel %vm270, %v245, 0
    %283 = vmatprep.subr.mxu0 0.0
    %284 = vmatpush1.msra.mxu0 %v238
    %285 = vmatprep.subr.mxu0 0.0
    %286 = vmatpush1.msra.mxu0 %v239
    %287 = vmatprep.subr.mxu0 0.0
    %288 = vmatpush1.msra.mxu0 %v240
    %289 = vmatprep.subr.mxu0 0.0
    %290 = vmatpush1.msra.mxu0 %v241
    %291 = vmatprep.subr.mxu0 0.0
    %292 = vmatpush1.msra.mxu0 0.0
    %293 = vmatprep.subr.mxu0 0.0
    %294 = vmatpush1.msra.mxu0 0.0
    %295 = vmatprep.subr.mxu0 0.0
    %296 = vmatpush1.msra.mxu0 0.0
    %297 = vmatprep.subr.mxu0 0.0
    %298 = vmatpush1.msra.mxu0 0.0
    %299 = vmatprep.subr.mxu0 0.0
    %300 = vmatpush1.msra.mxu0 0.0
    %301 = vmatprep.subr.mxu0 0.0
    %302 = vmatpush1.msra.mxu0 0.0
    %303 = vmatprep.subr.mxu0 0.0
    %304 = vmatpush1.msra.mxu0 0.0
    %305 = vmatprep.subr.mxu0 0.0
    %306 = vmatpush1.msra.mxu0 0.0
    %307 = vmatprep.subr.mxu0 0.0
    %308 = vmatpush1.msra.mxu0 0.0
    %309 = vmatprep.subr.mxu0 0.0
    %310 = vmatpush1.msra.mxu0 0.0
    %311 = vmatprep.subr.mxu0 0.0
    %312 = vmatpush1.msra.mxu0 0.0
    %313 = vmatprep.subr.mxu0 0.0
    %314 = vmatpush1.msra.mxu0 0.0
    %315 = vmatprep.subr.mxu0 0.0
    %316 = vmatpush1.msra.mxu0 0.0
    %317 = vmatprep.subr.mxu0 0.0
    %318 = vmatpush1.msra.mxu0 0.0
    %319 = vmatprep.subr.mxu0 0.0
    %320 = vmatpush1.msra.mxu0 0.0
    %321 = vmatprep.subr.mxu0 0.0
    %322 = vmatpush1.msra.mxu0 0.0
    %323 = vmatprep.subr.mxu0 0.0
    %324 = vmatpush1.msra.mxu0 0.0
    %325 = vmatprep.subr.mxu0 0.0
    %326 = vmatpush1.msra.mxu0 0.0
    %327 = vmatprep.subr.mxu0 0.0
    %328 = vmatpush1.msra.mxu0 0.0
    %329 = vmatprep.subr.mxu0 0.0
    %330 = vmatpush1.msra.mxu0 0.0
    %331 = vmatprep.subr.mxu0 0.0
    %332 = vmatpush1.msra.mxu0 0.0
    %333 = vmatprep.subr.mxu0 0.0
    %334 = vmatpush1.msra.mxu0 0.0
    %335 = vmatprep.subr.mxu0 0.0
    %336 = vmatpush1.msra.mxu0 0.0
    %337 = vmatprep.subr.mxu0 0.0
    %338 = vmatpush1.msra.mxu0 0.0
    %339 = vmatprep.subr.mxu0 0.0
    %340 = vmatpush1.msra.mxu0 0.0
    %341 = vmatprep.subr.mxu0 0.0
    %342 = vmatpush1.msra.mxu0 0.0
    %343 = vmatprep.subr.mxu0 0.0
    %344 = vmatpush1.msra.mxu0 0.0
    %345 = vmatprep.subr.mxu0 0.0
    %346 = vmatpush1.msra.mxu0 0.0
    %347 = vmatprep.mubr.f32.mxu0 0.0
    %348 = vmatmul.mubr.f32.gmra.mrb[0].mxu0 %v272
    %v349 = vpop.f32.mrb[0].mxu0
    %v350 = vadd.f32 %v253, %v349
    %v351 = vpop.f32.mrb[0].mxu0
    %352 = vmatprep.mubr.f32.mxu0 0.0
    %353 = vmatmul.mubr.f32.gmra.mrb[0].mxu0 %v275
    %v354 = vpop.f32.mrb[0].mxu0
    %v355 = vadd.f32 %v258, %v354
    %v356 = vpop.f32.mrb[0].mxu0
    %357 = vmatprep.mubr.f32.mxu0 0.0
    %358 = vmatmul.mubr.f32.gmra.mrb[0].mxu0 %v278
    %v359 = vpop.f32.mrb[0].mxu0
    %v360 = vadd.f32 %v263, %v359
    %v361 = vpop.f32.mrb[0].mxu0
    %362 = vmatprep.mubr.f32.mxu0 0.0
    %363 = vmatmul.mubr.f32.gmra.mrb[0].mxu0 %v281
    %v364 = vpop.f32.mrb[0].mxu0
    %v365 = vadd.f32 %v268, %v364
    %v366 = vpop.f32.mrb[0].mxu0
    %367 = vdwg.mxu0
    %v368 = vmax.f32 %v350, 0.0
    %v369 = vmax.f32 %v355, 0.0
    %v370 = vmax.f32 %v360, 0.0
    %v371 = vmax.f32 %v365, 0.0
    %v372 = vld [vmem:[%s6] sm:$0xff]
    %v373 = vld [vmem:[%s6 + $0x8] sm:$0xff]
    %v374 = vld [vmem:[%s6 + $0x10] sm:$0xff]
    %v375 = vld [vmem:[%s6 + $0x18] sm:$0xff]
    %377 = vset.pattern.permute.xlu0 0
    %378 = vperm.xlu0 %377, %v372
    %v379 = vpop.permute.xlu0 %378
    %382 = vset.pattern.permute.xlu0 0
    %383 = vperm.xlu0 %382, %v373
    %v384 = vpop.permute.xlu0 %383
    %387 = vset.pattern.permute.xlu0 0
    %388 = vperm.xlu0 %387, %v374
    %v389 = vpop.permute.xlu0 %388
    %392 = vset.pattern.permute.xlu0 0
    %393 = vperm.xlu0 %392, %v375
    %v394 = vpop.permute.xlu0 %393
    %v396 = vmul.f32 %v368, %v379
    %v397 = vmul.f32 %v369, %v384
    %v398 = vmul.f32 %v370, %v389
    %v399 = vmul.f32 %v371, %v394
    %vm400 = vcmask 64512
    %v401 = vsel %vm400, %v396, 0.0
    %v402 = vsel %vm400, %v397, 0.0
    %v403 = vadd.f32 %v401, %v402
    %v404 = vsel %vm400, %v398, 0.0
    %v405 = vadd.f32 %v403, %v404
    %v406 = vsel %vm400, %v399, 0.0
    %v407 = vadd.f32 %v405, %v406
    %v408 = vrot.slane %v407, 4
    %v409 = vadd.f32 %v407, %v408
    %v410 = vrot.slane %v409, 2
    %v411 = vadd.f32 %v409, %v410
    %v412 = vrot.slane %v411, 1
    %v413 = vadd.f32 %v411, %v412
    %v414 = vld [vmem:[#allocation2] sm:$0x1]
    %416 = vset.pattern.permute.xlu0 0
    %417 = vperm.xlu0 %416, %v414
    %v418 = vpop.permute.xlu0 %417
    %v420 = vlaneseq
    %v421 = vshrl.u32 %v420, 7
    %v422 = vsub.s32 0, %v421
    %v423 = vrot.slane %v418, %v422
    %v424 = vadd.f32 %v413, %v423
    %vm425 = vcmask 57344
    %426 = vst.msk [vmem:[#allocation3] sm:$0x1] %vm425, %v424
    // Predicated region
    $region34: #{critic_forward.1} parent=1 // pred_check
      _
    $region35: #{critic_forward.1} parent=1 // pred_check_branch
      %428 = sbr.rel (0) target = $region37
    $region36: #{critic_forward.1} parent=1 // pred_region
      %s430 = ssub.s32 16, 16
      %431 = vsyncadd [#allocation4], %s430
      %s433 = sshll.u32 [#allocation3], 4
      %s434 = int_to_ptr.vmem [resolvable:$true] %s433
      %436 = dma.vmem_to_hbm [thread:$0]  %s434, 16, %s8, [#allocation4]
    $region37: #{critic_forward.1} parent=1 // pred_fallthru
      _
    // Predicated region
    $region38: #{critic_forward.1} parent=1 // pred_check
      _
    $region39: #{critic_forward.1} parent=1 // pred_check_branch
      %438 = sbr.rel (0) target = $region41
    $region40: #{critic_forward.1} parent=1 // pred_region
      %439 = dma.done [#allocation4], 16
    $region41: #{critic_forward.1} parent=1 // pred_fallthru
      _
    %440 = vsyncpa [#allocation4], 1

</llo_original>
